<compile_context>
chip_gen: v7x
topology: tpu7x:2x2x1
jax: 0.10.0
libtpu: 0.0.40
codegen_flags: <defaults>
</compile_context>

<pallas_src>
import functools

import jax
import jax.numpy as jnp
from jax import lax
from jax.experimental import pallas as pl
from jax.experimental.pallas import tpu as pltpu

EPS = 1e-5
NEG_SLOPE = 0.2


def _unet_enc_kernel(p_ref, w_ref, o_ref, *, wo, hw, chunk, normalize,
                     channels_major):
    # p_ref: ((Ho+1)*Wo, 8*C_in) bf16 -- stride-2 phase-stacked padded input,
    #        column tap folded into channels; tap qi slab = p_ref[qi*Wo : qi*Wo+HW].
    # w_ref: (2, 8*C_in, TCO)     bf16 -- per row-tap weight slices
    # o_ref: (TCO, HW) f32 (channels_major) or (HW, TCO) f32
    tco = w_ref.shape[-1]
    nchunks = hw // chunk
    w0 = w_ref[0]
    w1 = w_ref[1]

    def conv_chunk(r0):
        a = jnp.dot(p_ref[r0:r0 + chunk, :], w0,
                    preferred_element_type=jnp.float32)
        return a + jnp.dot(p_ref[wo + r0:wo + r0 + chunk, :], w1,
                           preferred_element_type=jnp.float32)

    def store(r0, val):
        if channels_major:
            o_ref[:, r0:r0 + chunk] = jnp.transpose(val).astype(o_ref.dtype)
        else:
            o_ref[r0:r0 + chunk, :] = val.astype(o_ref.dtype)

    if not normalize:
        for ci in range(nchunks):
            r0 = ci * chunk
            a = conv_chunk(r0)
            store(r0, jnp.maximum(a, NEG_SLOPE * a))
        return

    if nchunks == 1:
        a = conv_chunk(0)
        inv_hw = 1.0 / hw
        mean = jnp.sum(a, axis=0, keepdims=True) * inv_hw
        var = jnp.sum(a * a, axis=0, keepdims=True) * inv_hw - mean * mean
        a = (a - mean) * lax.rsqrt(jnp.maximum(var, 0.0) + EPS)
        store(0, jnp.maximum(a, NEG_SLOPE * a))
        return

    # Chunked + instance norm: pass 1 writes raw conv chunks into the resident
    # output block while accumulating sum / sum-of-squares; pass 2 normalizes.
    s1 = jnp.zeros((1, tco), jnp.float32)
    s2 = jnp.zeros((1, tco), jnp.float32)
    for ci in range(nchunks):
        r0 = ci * chunk
        a = conv_chunk(r0)
        s1 = s1 + jnp.sum(a, axis=0, keepdims=True)
        s2 = s2 + jnp.sum(a * a, axis=0, keepdims=True)
        store(r0, a)

    inv_hw = 1.0 / hw
    mean = s1 * inv_hw
    var = jnp.maximum(s2 * inv_hw - mean * mean, 0.0)  # clamp f32 cancellation
    scale = lax.rsqrt(var + EPS)
    if channels_major:
        mean_c = jnp.transpose(mean)        # (tco, 1)
        scale_c = jnp.transpose(scale)
        for ci in range(nchunks):
            r0 = ci * chunk
            y = (o_ref[:, r0:r0 + chunk].astype(jnp.float32) - mean_c) * scale_c
            o_ref[:, r0:r0 + chunk] = jnp.maximum(y, NEG_SLOPE * y).astype(o_ref.dtype)
    else:
        for ci in range(nchunks):
            r0 = ci * chunk
            y = (o_ref[r0:r0 + chunk, :].astype(jnp.float32) - mean) * scale
            o_ref[r0:r0 + chunk, :] = jnp.maximum(y, NEG_SLOPE * y).astype(o_ref.dtype)


def unet_encoder_layer(x_nchw, weight_oihw, *, normalize=True, dropout=0.0):
    """x_nchw: (N, C_in, H, W), weight_oihw: (C_out, C_in, 4, 4). Returns NCHW."""
    # TODO(synk): dropout > 0 (training-mode nn.Dropout) not implemented here
    # (module default is dropout=0.0).
    N, C_in, H, W = x_nchw.shape
    C_out = weight_oihw.shape[0]
    assert H % 2 == 0 and W % 2 == 0, "k=4, s=2, p=1 layer expects even H, W"
    Ho, Wo = H // 2, W // 2
    Hp = Ho + 1
    K8 = 8 * C_in
    HW = Ho * Wo
    HpWo = Hp * Wo

    # ---- glue: one cheap XLA pass, ~2x input footprint, in bf16 --------------
    # phases[n, p*Wo + j, ((qj*2+a)*2+b)*C_in + c] = x_pad[n, c, 2p+a, 2(j+qj)+b]
    xpad = jnp.pad(x_nchw, ((0, 0), (0, 0), (1, 1), (1, 1)))
    ph = xpad.reshape(N, C_in, Hp, 2, Wo + 1, 2)
    ph4 = jnp.transpose(ph, (0, 2, 4, 3, 5, 1)).reshape(N, Hp, Wo + 1, 4 * C_in)
    phases = jnp.concatenate([ph4[:, :, 0:Wo, :], ph4[:, :, 1:Wo + 1, :]], axis=-1)
    phases = phases.reshape(N, HpWo, K8).astype(jnp.bfloat16)

    # weights regrouped to match: tap qi holds kernel offsets
    # (kh, kw) = (2*qi + a, 2*qj + b), rows ordered as (qj, a, b, c).
    wr = weight_oihw.reshape(C_out, C_in, 2, 2, 2, 2)     # (o, c, qi, a, qj, b)
    w2 = jnp.transpose(wr, (2, 4, 3, 5, 1, 0)).reshape(2, K8, C_out)
    w2 = w2.astype(jnp.bfloat16)

    # ---- tiling decisions -----------------------------------------------------
    if C_out % 256 == 0 and not (N == 1 and C_out == 256):
        tile_co = 256            # v6e/v7x MXU is 256 wide
    elif C_out % 128 == 0:
        tile_co = 128
    else:
        tile_co = C_out
    n_co = C_out // tile_co

    channels_major = (HW % 128 == 0)
    if channels_major:
        chunk = next(c for c in (2048, 1024, 512, 256, 128) if HW % c == 0)
    else:
        chunk = HW               # small spatial maps: single shot, (HW, C_out) out

    p_block = HpWo * K8 * 2
    w_block = 2 * K8 * tile_co * 2
    o_block = tile_co * HW * 4

    # Keep the bigger operand resident across the inner grid axis.
    if w_block > p_block:
        grid = (n_co, N)
        def _ix(a, b): return b, a       # -> (n, co)
    else:
        grid = (N, n_co)
        def _ix(a, b): return a, b       # -> (n, co)

    p_spec = pl.BlockSpec((pl.Squeezed(), HpWo, K8),
                          lambda a, b: (_ix(a, b)[0], 0, 0))
    w_spec = pl.BlockSpec((2, K8, tile_co),
                          lambda a, b: (0, 0, _ix(a, b)[1]))
    if channels_major:
        out_struct = jax.ShapeDtypeStruct((N, C_out, HW), x_nchw.dtype)
        o_spec = pl.BlockSpec((pl.Squeezed(), tile_co, HW),
                              lambda a, b: (_ix(a, b)[0], _ix(a, b)[1], 0))
    else:
        out_struct = jax.ShapeDtypeStruct((N, HW, C_out), x_nchw.dtype)
        o_spec = pl.BlockSpec((pl.Squeezed(), HW, tile_co),
                              lambda a, b: (_ix(a, b)[0], 0, _ix(a, b)[1]))

    vmem_limit = int(min(max(2 * (p_block + w_block + o_block)
                             + 3 * chunk * tile_co * 4 + (2 << 20),
                             16 << 20), 48 << 20))

    kernel = functools.partial(_unet_enc_kernel, wo=Wo, hw=HW, chunk=chunk,
                               normalize=normalize,
                               channels_major=channels_major)

    out = pl.pallas_call(
        kernel,
        out_shape=out_struct,
        grid_spec=pltpu.PrefetchScalarGridSpec(
            num_scalar_prefetch=0,
            grid=grid,
            in_specs=[p_spec, w_spec],
            out_specs=o_spec),
        compiler_params=pltpu.CompilerParams(
            dimension_semantics=("parallel", "parallel"),
            vmem_limit_bytes=vmem_limit),
        cost_estimate=pl.CostEstimate(
            flops=2 * N * HW * (16 * C_in) * C_out,
            transcendentals=N * C_out if normalize else 0,
            bytes_accessed=phases.size * 2 + w2.size * 2 + N * C_out * HW * 4),
    )(phases, w2)

    if channels_major:
        # (N, C_out, HW) -> NCHW via a contiguous reshape (no transpose).
        return out.reshape(N, C_out, Ho, Wo)
    # Small-HW layers: output was written (HW, C_out) lane-dense; tiny transpose.
    return jnp.transpose(out, (0, 2, 1)).reshape(N, C_out, Ho, Wo)


def _reference(x_nchw, weight_oihw):
    # Same numerics as the kernel's MXU path: bf16 products, f32 accumulation.
    y = lax.conv_general_dilated(
        x_nchw.astype(jnp.bfloat16), weight_oihw.astype(jnp.bfloat16),
        window_strides=(2, 2), padding=((1, 1), (1, 1)),
        dimension_numbers=("NCHW", "OIHW", "NCHW"),
        preferred_element_type=jnp.float32)
    mean = jnp.mean(y, axis=(2, 3), keepdims=True)
    var = jnp.mean((y - mean) ** 2, axis=(2, 3), keepdims=True)
    yn = (y - mean) * lax.rsqrt(var + EPS)
    return jnp.where(yn > 0, yn, NEG_SLOPE * yn)


if __name__ == "__main__":
    key = jax.random.PRNGKey(0)
    kx, kw = jax.random.split(key)

    N, C_in, H, W = 2, 4, 16, 16
    C_out = 8

    x = jax.random.normal(kx, (N, C_in, H, W), dtype=jnp.float32)
    # Conv2d(C_in, C_out, 4, 2, 1, bias=False) weights
    weight = 0.1 * jax.random.normal(kw, (C_out, C_in, 4, 4), dtype=jnp.float32)

    out = jax.block_until_ready(unet_encoder_layer(x, weight))
    ref = _reference(x, weight)

    assert out.shape == (N, C_out, H // 2, W // 2), out.shape
    max_err = float(jnp.max(jnp.abs(out - ref)))
    assert jnp.allclose(out, ref, rtol=5e-3, atol=5e-3), max_err

    print("KERNEL_OK")
</pallas_src>

<mosaic_0001>
module attributes {stable_mosaic.version = 11 : i64} {
  func.func @_unet_enc_kernel(%arg0: i32, %arg1: i32, %arg2: memref<1x72x32xbf16, #tpu.memory_space<vmem>>, %arg3: memref<2x32x8xbf16, #tpu.memory_space<vmem>>, %arg4: memref<1x64x8xf32, #tpu.memory_space<vmem>>) attributes {dimension_semantics = [#tpu.dimension_semantics<parallel>, #tpu.dimension_semantics<parallel>], iteration_bounds = array<i64: 2, 1>, scalar_prefetch = 0 : i64, scratch_operands = 0 : i64, tpu.core_type = #tpu.core_type<tc>, window_params = [{transform_indices = @transform_0, window_bounds = array<i64: 1, 72, 32>}, {transform_indices = @transform_1, window_bounds = array<i64: 2, 32, 8>}, {transform_indices = @transform_2, window_bounds = array<i64: 1, 64, 8>}]} {
    %c0 = arith.constant 0 : index
    %c0_0 = arith.constant 0 : index
    %c0_1 = arith.constant 0 : index
    %0 = vector.load %arg3[%c0, %c0_0, %c0_1] : memref<2x32x8xbf16, #tpu.memory_space<vmem>>, vector<1x32x8xbf16>
    %1 = vector.shape_cast %0 : vector<1x32x8xbf16> to vector<32x8xbf16>
    %c1 = arith.constant 1 : index
    %c0_2 = arith.constant 0 : index
    %c0_3 = arith.constant 0 : index
    %2 = vector.load %arg3[%c1, %c0_2, %c0_3] : memref<2x32x8xbf16, #tpu.memory_space<vmem>>, vector<1x32x8xbf16>
    %3 = vector.shape_cast %2 : vector<1x32x8xbf16> to vector<32x8xbf16>
    %c0_4 = arith.constant 0 : index
    %c0_5 = arith.constant 0 : index
    %c0_6 = arith.constant 0 : index
    %4 = vector.load %arg2[%c0_4, %c0_5, %c0_6] : memref<1x72x32xbf16, #tpu.memory_space<vmem>>, vector<1x64x32xbf16>
    %5 = vector.shape_cast %4 : vector<1x64x32xbf16> to vector<64x32xbf16>
    %cst = arith.constant dense<0.000000e+00> : vector<64x8xf32>
    %6 = tpu.matmul %5, %1, %cst {dimension_numbers = #tpu.dot_dimension_numbers<[1], [0], [0], [1], [0, 0, 1, 1], [], []>} : vector<64x32xbf16>, vector<32x8xbf16>, vector<64x8xf32> -> vector<64x8xf32>
    %c0_7 = arith.constant 0 : index
    %c8 = arith.constant 8 : index
    %c0_8 = arith.constant 0 : index
    %7 = vector.load %arg2[%c0_7, %c8, %c0_8] : memref<1x72x32xbf16, #tpu.memory_space<vmem>>, vector<1x64x32xbf16>
    %8 = vector.shape_cast %7 : vector<1x64x32xbf16> to vector<64x32xbf16>
    %cst_9 = arith.constant dense<0.000000e+00> : vector<64x8xf32>
    %9 = tpu.matmul %8, %3, %cst_9 {dimension_numbers = #tpu.dot_dimension_numbers<[1], [0], [0], [1], [0, 0, 1, 1], [], []>} : vector<64x32xbf16>, vector<32x8xbf16>, vector<64x8xf32> -> vector<64x8xf32>
    %10 = arith.addf %6, %9 : vector<64x8xf32>
    %cst_10 = arith.constant dense<0.000000e+00> : vector<8xf32>
    %11 = vector.multi_reduction <add>, %10, %cst_10 [0] : vector<64x8xf32> to vector<8xf32>
    %12 = vector.shape_cast %11 : vector<8xf32> to vector<1x8xf32>
    %cst_11 = arith.constant 1.562500e-02 : f32
    %13 = vector.broadcast %cst_11 : f32 to vector<1x8xf32>
    %14 = arith.mulf %12, %13 : vector<1x8xf32>
    %15 = arith.mulf %10, %10 : vector<64x8xf32>
    %cst_12 = arith.constant dense<0.000000e+00> : vector<8xf32>
    %16 = vector.multi_reduction <add>, %15, %cst_12 [0] : vector<64x8xf32> to vector<8xf32>
    %17 = vector.shape_cast %16 : vector<8xf32> to vector<1x8xf32>
    %cst_13 = arith.constant 1.562500e-02 : f32
    %18 = vector.broadcast %cst_13 : f32 to vector<1x8xf32>
    %19 = arith.mulf %17, %18 : vector<1x8xf32>
    %20 = arith.mulf %14, %14 : vector<1x8xf32>
    %21 = arith.subf %19, %20 : vector<1x8xf32>
    %22 = vector.broadcast %14 : vector<1x8xf32> to vector<64x8xf32>
    %23 = arith.subf %10, %22 : vector<64x8xf32>
    %cst_14 = arith.constant 0.000000e+00 : f32
    %24 = vector.broadcast %cst_14 : f32 to vector<1x8xf32>
    %25 = arith.maximumf %21, %24 : vector<1x8xf32>
    %cst_15 = arith.constant 9.99999974E-6 : f32
    %26 = vector.broadcast %cst_15 : f32 to vector<1x8xf32>
    %27 = arith.addf %25, %26 : vector<1x8xf32>
    %28 = math.rsqrt %27 : vector<1x8xf32>
    %29 = vector.broadcast %28 : vector<1x8xf32> to vector<64x8xf32>
    %30 = arith.mulf %23, %29 : vector<64x8xf32>
    %cst_16 = arith.constant 2.000000e-01 : f32
    %31 = vector.broadcast %cst_16 : f32 to vector<64x8xf32>
    %32 = arith.mulf %31, %30 : vector<64x8xf32>
    %33 = arith.maximumf %30, %32 : vector<64x8xf32>
    %c0_17 = arith.constant 0 : index
    %c0_18 = arith.constant 0 : index
    %c0_19 = arith.constant 0 : index
    %34 = vector.load %arg4[%c0_17, %c0_18, %c0_19] : memref<1x64x8xf32, #tpu.memory_space<vmem>>, vector<1x64x8xf32>
    %35 = vector.shape_cast %34 : vector<1x64x8xf32> to vector<64x8xf32>
    %36 = vector.shape_cast %33 : vector<64x8xf32> to vector<1x64x8xf32>
    tpu.vector_store %arg4[%c0_17, %c0_18, %c0_19], %36 {strides = array<i32>} : memref<1x64x8xf32, #tpu.memory_space<vmem>>, vector<1x64x8xf32>,
    return
  }
  func.func @transform_0(%arg0: i32, %arg1: i32) -> (i32, i32, i32) {
    %c0_i32 = arith.constant 0 : i32
    %c0_i32_0 = arith.constant 0 : i32
    %c0_i32_1 = arith.constant 0 : i32
    return %arg0, %c0_i32, %c0_i32_0 : i32, i32, i32
  }
  func.func @transform_1(%arg0: i32, %arg1: i32) -> (i32, i32, i32) {
    %c0_i32 = arith.constant 0 : i32
    %c0_i32_0 = arith.constant 0 : i32
    %c0_i32_1 = arith.constant 0 : i32
    return %c0_i32, %c0_i32_0, %arg1 : i32, i32, i32
  }
  func.func @transform_2(%arg0: i32, %arg1: i32) -> (i32, i32, i32) {
    %c0_i32 = arith.constant 0 : i32
    %c0_i32_0 = arith.constant 0 : i32
    return %arg0, %c0_i32, %arg1 : i32, i32, i32
  }
}

</mosaic_0001>

<llo_original>
// kernel: tpu_custom_call.1
$region0: #{tpu_custom_call.1}
  #allocation0 [shape = 'u32[]', space=smem, size = 0x4, offset = 0x4, fixed_abs, tag = 'smem constant byte address 0x4 - core index']
  #allocation1 [shape = 'u32[144,128]{1,0:T(1,128)}', space=vmem, size = 0x12000, scoped, tag = 'internal scratch']
  %s0 = inlined_call_operand.vmem [shape: bf16[2,72,32], index: 0, kind: input, shape index: {}]
  %s1 = inlined_call_operand.vmem [shape: bf16[2,32,8], index: 1, kind: input, shape index: {}]
  %s2 = inlined_call_operand.vmem [shape: f32[2,64,8], index: 2, kind: output, shape index: {}]
  %s3 = sld [smem:[#allocation0]]
  $region41: #{tpu_custom_call.1} parent=0
    _
  %s5 = ssub.s32 1, %s3
  %s6 = scalar_select 0, %s5, %s3
  loop: start=0, step=1, limit=4
  $region2: #{tpu_custom_call.1} parent=0 // loop_pre_header
    _
  $region3: #{tpu_custom_call.1} parent=0 // loop_header
    %s8 = sphi 0, %s12
    %p9 = scmp.ge.s32.totalorder %s8, 4
    %s15 = sphi 0, %s27
    %s16 = sphi 0, %s23
    %s17 = sphi 0, %s15
    %s18 = sphi 0, %s16
    %s19 = sphi 0, %s17
    %s20 = sphi 0, %s18
    %s30 = sphi 0, %s32
    %s33 = sphi 0, %s30
    %s34 = sphi 0, %s33
    %s50 = sphi 0, %s34
    %s56 = sphi 0, %s58
    %s59 = sphi 0, %s56
    %s60 = sphi 0, %s59
    %s76 = sphi 0, %s60
    %s84 = sphi 0, %s86
    %s87 = sphi 0, %s84
    %s88 = sphi 0, %s87
    %s104 = sphi 0, %s88
  $region4: #{tpu_custom_call.1} parent=0 // loop_header_branch
    %11 = sbr.rel (%p9) target = $region8
  $region5: #{tpu_custom_call.1} parent=0 // loop_body
    %s13 = ssub.s32 %s8, 1
    %s14 = ssub.s32 %s8, 2
    %s21 = sadd.s32 1, %s16
    %p22 = scmp.ge.s32.totalorder %s21, 1
    %s23 = scalar_select %p22, 0, %s21
    %s24 = sadd.s32 1, %s15
    %s25 = scalar_select %p22, %s24, %s15
    %p26 = scmp.ge.s32.totalorder %s25, 2
    %s27 = scalar_select %p26, 0, %s25
    %s28 = ssub.s32 %s15, %s27
    %p29 = scmp.eq.s32.totalorder %s28, 0
    %s31 = sadd.s32 %s30, 1
    %s32 = scalar_select %p29, %s30, %s31
    %p35 = pneg %p29
    %p36 = scmp.eq.s32.totalorder %s8, 1
    %p37 = por %p35, %p36
    %p38 = scmp.ne.s32.totalorder %s30, %s33
    %p39 = scmp.eq.s32.totalorder %s8, 0
    %p40 = por %p38, %p39
    %p41 = scmp.ne.s32.totalorder %s30, %s33
    %p42 = scmp.eq.s32.totalorder %s13, 1
    %p43 = por %p41, %p42
    %p44 = scmp.ne.s32.totalorder %s33, %s34
    %p45 = scmp.eq.s32.totalorder %s13, 0
    %p46 = por %p44, %p45
    %p47 = scmp.ne.s32.totalorder %s33, %s34
    %p48 = scmp.eq.s32.totalorder %s14, 1
    %p49 = por %p47, %p48
    %p51 = scmp.ne.s32.totalorder %s34, %s50
    %p52 = scmp.eq.s32.totalorder %s14, 0
    %p53 = por %p51, %p52
    %s54 = ssub.s32 %s16, %s23
    %p55 = scmp.eq.s32.totalorder %s54, 0
    %s57 = sadd.s32 %s56, 1
    %s58 = scalar_select %p55, %s56, %s57
    %p61 = pneg %p55
    %p62 = scmp.eq.s32.totalorder %s8, 1
    %p63 = por %p61, %p62
    %p64 = scmp.ne.s32.totalorder %s56, %s59
    %p65 = scmp.eq.s32.totalorder %s8, 0
    %p66 = por %p64, %p65
    %p67 = scmp.ne.s32.totalorder %s56, %s59
    %p68 = scmp.eq.s32.totalorder %s13, 1
    %p69 = por %p67, %p68
    %p70 = scmp.ne.s32.totalorder %s59, %s60
    %p71 = scmp.eq.s32.totalorder %s13, 0
    %p72 = por %p70, %p71
    %p73 = scmp.ne.s32.totalorder %s59, %s60
    %p74 = scmp.eq.s32.totalorder %s14, 1
    %p75 = por %p73, %p74
    %p77 = scmp.ne.s32.totalorder %s60, %s76
    %p78 = scmp.eq.s32.totalorder %s14, 0
    %p79 = por %p77, %p78
    %s80 = ssub.s32 %s15, %s27
    %s81 = ssub.s32 %s16, %s23
    %s82 = sor.u32 %s80, %s81
    %p83 = scmp.eq.s32.totalorder %s82, 0
    %s85 = sadd.s32 %s84, 1
    %s86 = scalar_select %p83, %s84, %s85
    %p89 = pneg %p83
    %p90 = scmp.eq.s32.totalorder %s8, 1
    %p91 = por %p89, %p90
    %p92 = scmp.ne.s32.totalorder %s84, %s87
    %p93 = scmp.eq.s32.totalorder %s8, 0
    %p94 = por %p92, %p93
    %p95 = scmp.ne.s32.totalorder %s84, %s87
    %p96 = scmp.eq.s32.totalorder %s13, 1
    %p97 = por %p95, %p96
    %p98 = scmp.ne.s32.totalorder %s87, %s88
    %p99 = scmp.eq.s32.totalorder %s13, 0
    %p100 = por %p98, %p99
    %p101 = scmp.ne.s32.totalorder %s87, %s88
    %p102 = scmp.eq.s32.totalorder %s14, 1
    %p103 = por %p101, %p102
    %p105 = scmp.ne.s32.totalorder %s88, %s104
    %p106 = scmp.eq.s32.totalorder %s14, 0
    %p107 = por %p105, %p106
    %p108 = scmp.le.s32.totalorder 1, %s8
    %p109 = scmp.lt.s32.totalorder %s8, 3
    %p110 = pnand %p108, %p109
    %p111 = pneg %p110
    // Predicated region
    $region9: #{tpu_custom_call.1} parent=5 // pred_check
      _
    $region10: #{tpu_custom_call.1} parent=5 // pred_check_branch
      %113 = sbr.rel (%p110) target = $region12
    $region11: #{tpu_custom_call.1} parent=5 // pred_region
      %s114 = ssub.s32 %s8, 1
      // Predicated region
      $region13: #{tpu_custom_call.1} parent=11 // pred_check
        %p115 = pneg %p72
      $region14: #{tpu_custom_call.1} parent=11 // pred_check_branch
        %117 = sbr.rel (%p115) target = $region16
      $region15: #{tpu_custom_call.1} parent=11 // pred_region
        %p118 = scmp.lt.s32.totalorder %s18, 0
        %s119 = scalar_select %p118, %s18, 0
        %s120 = smul.addr %s119, 4
        %s121 = scalar_lea.vmem %s1, %s120
      $region16: #{tpu_custom_call.1} parent=11 // pred_fallthru
        _
    $region12: #{tpu_custom_call.1} parent=5 // pred_fallthru
      _
    %p122 = scmp.lt.s32.totalorder %s8, 2
    // Predicated region
    $region17: #{tpu_custom_call.1} parent=5 // pred_check
      %p123 = pneg %p122
    $region18: #{tpu_custom_call.1} parent=5 // pred_check_branch
      %125 = sbr.rel (%p123) target = $region20
    $region19: #{tpu_custom_call.1} parent=5 // pred_region
      // Predicated region
      $region21: #{tpu_custom_call.1} parent=19 // pred_check
        %p126 = pneg %p40
      $region22: #{tpu_custom_call.1} parent=19 // pred_check_branch
        %128 = sbr.rel (%p126) target = $region24
      $region23: #{tpu_custom_call.1} parent=19 // pred_region
        %p129 = scmp.lt.s32.totalorder %s15, 1
        %s130 = scalar_select %p129, %s15, 1
        %s131 = smul.addr %s130, 9
        %s132 = smul.addr %s131, 4
        %s133 = scalar_lea.vmem %s0, %s132
      $region24: #{tpu_custom_call.1} parent=19 // pred_fallthru
        _
    $region20: #{tpu_custom_call.1} parent=5 // pred_fallthru
      _
    %p134 = scmp.le.s32.totalorder 1, %s8
    %p135 = scmp.lt.s32.totalorder %s8, 3
    %p136 = pnand %p134, %p135
    %p137 = pneg %p136
    // Predicated region
    $region25: #{tpu_custom_call.1} parent=5 // pred_check
      _
    $region26: #{tpu_custom_call.1} parent=5 // pred_check_branch
      %139 = sbr.rel (%p136) target = $region28
    $region27: #{tpu_custom_call.1} parent=5 // pred_region
      %s140 = ssub.s32 %s8, 1
      %p141 = scmp.lt.s32.totalorder %s17, 1
      %s142 = scalar_select %p141, %s17, 1
      %s143 = smul.addr %s142, 9
      %s144 = smul.addr %s143, 4
      %s145 = scalar_lea.vmem %s0, %s144
      %p146 = pneg %p46
      %p147 = pneg %p43
      %p148 = scmp.lt.s32.totalorder %s18, 0
      %s149 = scalar_select %p148, %s18, 0
      %s150 = smul.addr %s149, 4
      %s151 = scalar_lea.vmem %s1, %s150
      %p152 = pneg %p72
      %p153 = pneg %p69
      %p154 = pneg %p100
      %p155 = pneg %p97
      %p156 = scmp.lt.s32.totalorder %s17, 1
      %s157 = scalar_select %p156, %s17, 1
      %p158 = scmp.lt.s32.totalorder %s18, 0
      %s159 = scalar_select %p158, %s18, 0
      %s160 = smul.addr %s157, 8
      %s161 = sadd.s32 %s159, %s160
      %s162 = smul.addr %s161, 8
      %s163 = scalar_lea.vmem %s2, %s162
      %p164 = scmp.lt.s32.totalorder %s17, 1
      %s165 = scalar_select %p164, %s17, 1
      %s166 = smul.addr %s165, 9
      %s167 = smul.addr %s166, 4
      %s168 = scalar_lea.vmem %s0, %s167
      %p169 = scmp.lt.s32.totalorder %s18, 0
      %s170 = scalar_select %p169, %s18, 0
      %s171 = smul.addr %s170, 4
      %s172 = scalar_lea.vmem %s1, %s171
      %p173 = scmp.lt.s32.totalorder %s17, 1
      %s174 = scalar_select %p173, %s17, 1
      %p175 = scmp.lt.s32.totalorder %s18, 0
      %s176 = scalar_select %p175, %s18, 0
      %s177 = smul.addr %s174, 8
      %s178 = sadd.s32 %s176, %s177
      %s179 = smul.addr %s178, 8
      %s180 = scalar_lea.vmem %s2, %s179
      %v182 = vld [vmem:[%s172] sm:$0xf]
      %v183 = vld [vmem:[%s172 + $0x4] sm:$0xf]
      %v184 = vld [vmem:[%s172 + $0x8] sm:$0xf]
      %v185 = vld [vmem:[%s172 + $0xc] sm:$0xf]
      %s186 = scalar_lea.vmem %s172, 16
      %v187 = vld [vmem:[%s186] sm:$0xf]
      %v188 = vld [vmem:[%s186 + $0x4] sm:$0xf]
      %v189 = vld [vmem:[%s186 + $0x8] sm:$0xf]
      %v190 = vld [vmem:[%s186 + $0xc] sm:$0xf]
      %v191 = vld [vmem:[%s168] sm:$0xf]
      %v192 = vld [vmem:[%s168 + $0x4] sm:$0xf]
      %v193 = vld [vmem:[%s168 + $0x8] sm:$0xf]
      %v194 = vld [vmem:[%s168 + $0xc] sm:$0xf]
      %v195 = vld [vmem:[%s168 + $0x10] sm:$0xf]
      %v196 = vld [vmem:[%s168 + $0x14] sm:$0xf]
      %v197 = vld [vmem:[%s168 + $0x18] sm:$0xf]
      %v198 = vld [vmem:[%s168 + $0x1c] sm:$0xf]
      %v199 = vld [vmem:[%s168 + $0x20] sm:$0xf]
      %v208 = vunpack.c.l.b16 %v192
      %v209 = vunpack.c.l.b16 %v193
      %v210 = vunpack.c.l.b16 %v194
      %v211 = vunpack.c.l.b16 %v195
      %v212 = vunpack.c.l.b16 %v196
      %v213 = vunpack.c.l.b16 %v197
      %v214 = vunpack.c.l.b16 %v198
      %v215 = vunpack.c.l.b16 %v199
      %v216 = vpack.c.b16 %v209, %v208
      %v217 = vpack.c.b16 %v211, %v210
      %v218 = vpack.c.b16 %v213, %v212
      %v219 = vpack.c.b16 %v215, %v214
      %v224 = vunpack.c.l.b16 %v187
      %v225 = vunpack.c.l.b16 %v188
      %v226 = vunpack.c.l.b16 %v189
      %v227 = vunpack.c.l.b16 %v190
      %v228 = vpack.c.b16 %v225, %v224
      %v229 = vpack.c.b16 %v227, %v226
      %vm232 = vcmask 261120
      %v234 = vsel %vm232, %v216, 0
      %v237 = vsel %vm232, %v217, 0
      %v240 = vsel %vm232, %v218, 0
      %v243 = vsel %vm232, %v219, 0
      %245 = vmatprep.subr.bf16.mxu0 0
      %246 = vmatpush1.bf16.msra.mxu0 %v228
      %247 = vmatprep.subr.bf16.mxu0 0
      %248 = vmatpush1.bf16.msra.mxu0 %v229
      %249 = vmatprep.subr.bf16.mxu0 0
      %250 = vmatpush1.bf16.msra.mxu0 0
      %251 = vmatprep.subr.bf16.mxu0 0
      %252 = vmatpush1.bf16.msra.mxu0 0
      %253 = vmatprep.subr.bf16.mxu0 0
      %254 = vmatpush1.bf16.msra.mxu0 0
      %255 = vmatprep.subr.bf16.mxu0 0
      %256 = vmatpush1.bf16.msra.mxu0 0
      %257 = vmatprep.subr.bf16.mxu0 0
      %258 = vmatpush1.bf16.msra.mxu0 0
      %259 = vmatprep.subr.bf16.mxu0 0
      %260 = vmatpush1.bf16.msra.mxu0 0
      %261 = vmatprep.subr.bf16.mxu0 0
      %262 = vmatpush1.bf16.msra.mxu0 0
      %263 = vmatprep.subr.bf16.mxu0 0
      %264 = vmatpush1.bf16.msra.mxu0 0
      %265 = vmatprep.subr.bf16.mxu0 0
      %266 = vmatpush1.bf16.msra.mxu0 0
      %267 = vmatprep.subr.bf16.mxu0 0
      %268 = vmatpush1.bf16.msra.mxu0 0
      %269 = vmatprep.subr.bf16.mxu0 0
      %270 = vmatpush1.bf16.msra.mxu0 0
      %271 = vmatprep.subr.bf16.mxu0 0
      %272 = vmatpush1.bf16.msra.mxu0 0
      %273 = vmatprep.subr.bf16.mxu0 0
      %274 = vmatpush1.bf16.msra.mxu0 0
      %275 = vmatprep.subr.bf16.mxu0 0
      %276 = vmatpush1.bf16.msra.mxu0 0
      %277 = vmatprep.mubr.bf16.mxu0 0
      %278 = vmatmul.mubr.bf16.gmra.mrb[0].mxu0 %v234
      %v279 = vpop.f32.mrb[0].mxu0
      %v280 = vadd.f32 0.0, %v279
      %v281 = vpop.f32.mrb[0].mxu0
      %v282 = vpop.f32.mrb[0].mxu0
      %v283 = vadd.f32 0.0, %v282
      %v284 = vpop.f32.mrb[0].mxu0
      %285 = vmatprep.mubr.bf16.mxu0 0
      %286 = vmatmul.mubr.bf16.gmra.mrb[0].mxu0 %v237
      %v287 = vpop.f32.mrb[0].mxu0
      %v288 = vadd.f32 0.0, %v287
      %v289 = vpop.f32.mrb[0].mxu0
      %v290 = vpop.f32.mrb[0].mxu0
      %v291 = vadd.f32 0.0, %v290
      %v292 = vpop.f32.mrb[0].mxu0
      %293 = vmatprep.mubr.bf16.mxu0 0
      %294 = vmatmul.mubr.bf16.gmra.mrb[0].mxu0 %v240
      %v295 = vpop.f32.mrb[0].mxu0
      %v296 = vadd.f32 0.0, %v295
      %v297 = vpop.f32.mrb[0].mxu0
      %v298 = vpop.f32.mrb[0].mxu0
      %v299 = vadd.f32 0.0, %v298
      %v300 = vpop.f32.mrb[0].mxu0
      %301 = vmatprep.mubr.bf16.mxu0 0
      %302 = vmatmul.mubr.bf16.gmra.mrb[0].mxu0 %v243
      %v303 = vpop.f32.mrb[0].mxu0
      %v304 = vadd.f32 0.0, %v303
      %v305 = vpop.f32.mrb[0].mxu0
      %v306 = vpop.f32.mrb[0].mxu0
      %v307 = vadd.f32 0.0, %v306
      %v308 = vpop.f32.mrb[0].mxu0
      %309 = vdwg.mxu0
      %v311 = vunpack.c.l.b16 %v191
      %v312 = vpack.c.b16 %v208, %v311
      %v313 = vpack.c.b16 %v210, %v209
      %v314 = vpack.c.b16 %v212, %v211
      %v315 = vpack.c.b16 %v214, %v213
      %v320 = vunpack.c.l.b16 %v182
      %v321 = vunpack.c.l.b16 %v183
      %v322 = vunpack.c.l.b16 %v184
      %v323 = vunpack.c.l.b16 %v185
      %v324 = vpack.c.b16 %v321, %v320
      %v325 = vpack.c.b16 %v323, %v322
      %v329 = vsel %vm232, %v312, 0
      %v332 = vsel %vm232, %v313, 0
      %v335 = vsel %vm232, %v314, 0
      %v338 = vsel %vm232, %v315, 0
      %340 = vmatprep.subr.bf16.mxu0 0
      %341 = vmatpush1.bf16.msra.mxu0 %v324
      %342 = vmatprep.subr.bf16.mxu0 0
      %343 = vmatpush1.bf16.msra.mxu0 %v325
      %344 = vmatprep.subr.bf16.mxu0 0
      %345 = vmatpush1.bf16.msra.mxu0 0
      %346 = vmatprep.subr.bf16.mxu0 0
      %347 = vmatpush1.bf16.msra.mxu0 0
      %348 = vmatprep.subr.bf16.mxu0 0
      %349 = vmatpush1.bf16.msra.mxu0 0
      %350 = vmatprep.subr.bf16.mxu0 0
      %351 = vmatpush1.bf16.msra.mxu0 0
      %352 = vmatprep.subr.bf16.mxu0 0
      %353 = vmatpush1.bf16.msra.mxu0 0
      %354 = vmatprep.subr.bf16.mxu0 0
      %355 = vmatpush1.bf16.msra.mxu0 0
      %356 = vmatprep.subr.bf16.mxu0 0
      %357 = vmatpush1.bf16.msra.mxu0 0
      %358 = vmatprep.subr.bf16.mxu0 0
      %359 = vmatpush1.bf16.msra.mxu0 0
      %360 = vmatprep.subr.bf16.mxu0 0
      %361 = vmatpush1.bf16.msra.mxu0 0
      %362 = vmatprep.subr.bf16.mxu0 0
      %363 = vmatpush1.bf16.msra.mxu0 0
      %364 = vmatprep.subr.bf16.mxu0 0
      %365 = vmatpush1.bf16.msra.mxu0 0
      %366 = vmatprep.subr.bf16.mxu0 0
      %367 = vmatpush1.bf16.msra.mxu0 0
      %368 = vmatprep.subr.bf16.mxu0 0
      %369 = vmatpush1.bf16.msra.mxu0 0
      %370 = vmatprep.subr.bf16.mxu0 0
      %371 = vmatpush1.bf16.msra.mxu0 0
      %372 = vmatprep.mubr.bf16.mxu0 0
      %373 = vmatmul.mubr.bf16.gmra.mrb[0].mxu0 %v329
      %v374 = vpop.f32.mrb[0].mxu0
      %v375 = vadd.f32 %v280, %v374
      %v376 = vpop.f32.mrb[0].mxu0
      %v377 = vpop.f32.mrb[0].mxu0
      %v378 = vadd.f32 %v283, %v377
      %v379 = vpop.f32.mrb[0].mxu0
      %380 = vmatprep.mubr.bf16.mxu0 0
      %381 = vmatmul.mubr.bf16.gmra.mrb[0].mxu0 %v332
      %v382 = vpop.f32.mrb[0].mxu0
      %v383 = vadd.f32 %v288, %v382
      %v384 = vpop.f32.mrb[0].mxu0
      %v385 = vpop.f32.mrb[0].mxu0
      %v386 = vadd.f32 %v291, %v385
      %v387 = vpop.f32.mrb[0].mxu0
      %388 = vmatprep.mubr.bf16.mxu0 0
      %389 = vmatmul.mubr.bf16.gmra.mrb[0].mxu0 %v335
      %v390 = vpop.f32.mrb[0].mxu0
      %v391 = vadd.f32 %v296, %v390
      %v392 = vpop.f32.mrb[0].mxu0
      %v393 = vpop.f32.mrb[0].mxu0
      %v394 = vadd.f32 %v299, %v393
      %v395 = vpop.f32.mrb[0].mxu0
      %396 = vmatprep.mubr.bf16.mxu0 0
      %397 = vmatmul.mubr.bf16.gmra.mrb[0].mxu0 %v338
      %v398 = vpop.f32.mrb[0].mxu0
      %v399 = vadd.f32 %v304, %v398
      %v400 = vpop.f32.mrb[0].mxu0
      %v401 = vpop.f32.mrb[0].mxu0
      %v402 = vadd.f32 %v307, %v401
      %v403 = vpop.f32.mrb[0].mxu0
      %404 = vdwg.mxu0
      %vm405 = vcmask 64512
      %v406 = vsel %vm405, %v375, 0.0
      %v407 = vsel %vm405, %v378, 0.0
      %v408 = vadd.f32 %v406, %v407
      %v409 = vsel %vm405, %v383, 0.0
      %v410 = vadd.f32 %v408, %v409
      %v411 = vsel %vm405, %v386, 0.0
      %v412 = vadd.f32 %v410, %v411
      %v413 = vsel %vm405, %v391, 0.0
      %v414 = vadd.f32 %v412, %v413
      %v415 = vsel %vm405, %v394, 0.0
      %v416 = vadd.f32 %v414, %v415
      %v417 = vsel %vm405, %v399, 0.0
      %v418 = vadd.f32 %v416, %v417
      %v419 = vsel %vm405, %v402, 0.0
      %v420 = vadd.f32 %v418, %v419
      %v421 = vrot.slane %v420, 4
      %v422 = vadd.f32 %v420, %v421
      %v423 = vrot.slane %v422, 2
      %v424 = vadd.f32 %v422, %v423
      %v425 = vrot.slane %v424, 1
      %v426 = vadd.f32 %v424, %v425
      %v427 = vmul.f32 %v426, 0.015625
      %v428 = vmul.f32 %v375, %v375
      %v429 = vmul.f32 %v378, %v378
      %v430 = vmul.f32 %v383, %v383
      %v431 = vmul.f32 %v386, %v386
      %v432 = vmul.f32 %v391, %v391
      %v433 = vmul.f32 %v394, %v394
      %v434 = vmul.f32 %v399, %v399
      %v435 = vmul.f32 %v402, %v402
      %v436 = vsel %vm405, %v428, 0.0
      %v437 = vsel %vm405, %v429, 0.0
      %v438 = vadd.f32 %v436, %v437
      %v439 = vsel %vm405, %v430, 0.0
      %v440 = vadd.f32 %v438, %v439
      %v441 = vsel %vm405, %v431, 0.0
      %v442 = vadd.f32 %v440, %v441
      %v443 = vsel %vm405, %v432, 0.0
      %v444 = vadd.f32 %v442, %v443
      %v445 = vsel %vm405, %v433, 0.0
      %v446 = vadd.f32 %v444, %v445
      %v447 = vsel %vm405, %v434, 0.0
      %v448 = vadd.f32 %v446, %v447
      %v449 = vsel %vm405, %v435, 0.0
      %v450 = vadd.f32 %v448, %v449
      %v451 = vrot.slane %v450, 4
      %v452 = vadd.f32 %v450, %v451
      %v453 = vrot.slane %v452, 2
      %v454 = vadd.f32 %v452, %v453
      %v455 = vrot.slane %v454, 1
      %v456 = vadd.f32 %v454, %v455
      %v457 = vmul.f32 %v456, 0.015625
      %v458 = vmul.f32 %v427, %v427
      %v459 = vsub.f32 %v457, %v458
      %v460 = vsub.f32 %v375, %v427
      %v461 = vsub.f32 %v378, %v427
      %v462 = vsub.f32 %v383, %v427
      %v463 = vsub.f32 %v386, %v427
      %v464 = vsub.f32 %v391, %v427
      %v465 = vsub.f32 %v394, %v427
      %v466 = vsub.f32 %v399, %v427
      %v467 = vsub.f32 %v402, %v427
      %v468 = vmax.f32 %v459, 0.0
      %v469 = vadd.f32 %v468, 1e-05
      %v470 = vrsqrt.pop %v469
      %v471 = vmul.f32 %v460, %v470
      %v472 = vmul.f32 %v461, %v470
      %v473 = vmul.f32 %v462, %v470
      %v474 = vmul.f32 %v463, %v470
      %v475 = vmul.f32 %v464, %v470
      %v476 = vmul.f32 %v465, %v470
      %v477 = vmul.f32 %v466, %v470
      %v478 = vmul.f32 %v467, %v470
      %v479 = vmul.f32 %v471, 0.2
      %v480 = vmul.f32 %v472, 0.2
      %v481 = vmul.f32 %v473, 0.2
      %v482 = vmul.f32 %v474, 0.2
      %v483 = vmul.f32 %v475, 0.2
      %v484 = vmul.f32 %v476, 0.2
      %v485 = vmul.f32 %v477, 0.2
      %v486 = vmul.f32 %v478, 0.2
      %v487 = vmax.f32 %v471, %v479
      %v488 = vmax.f32 %v472, %v480
      %v489 = vmax.f32 %v473, %v481
      %v490 = vmax.f32 %v474, %v482
      %v491 = vmax.f32 %v475, %v483
      %v492 = vmax.f32 %v476, %v484
      %v493 = vmax.f32 %v477, %v485
      %v494 = vmax.f32 %v478, %v486
      %495 = vst.msk [vmem:[%s180] sm:$0xff] %vm405, %v487
      %496 = vst.msk [vmem:[%s180 + $0x8] sm:$0xff] %vm405, %v488
      %497 = vst.msk [vmem:[%s180 + $0x10] sm:$0xff] %vm405, %v489
      %498 = vst.msk [vmem:[%s180 + $0x18] sm:$0xff] %vm405, %v490
      %499 = vst.msk [vmem:[%s180 + $0x20] sm:$0xff] %vm405, %v491
      %500 = vst.msk [vmem:[%s180 + $0x28] sm:$0xff] %vm405, %v492
      %501 = vst.msk [vmem:[%s180 + $0x30] sm:$0xff] %vm405, %v493
      %502 = vst.msk [vmem:[%s180 + $0x38] sm:$0xff] %vm405, %v494
      %p503 = scmp.lt.s32.totalorder %s17, 1
      %s504 = scalar_select %p503, %s17, 1
      %p505 = scmp.lt.s32.totalorder %s18, 0
      %s506 = scalar_select %p505, %s18, 0
      %s507 = smul.addr %s504, 8
      %s508 = sadd.s32 %s506, %s507
      %s509 = smul.addr %s508, 8
      %s510 = scalar_lea.vmem %s2, %s509
      // Predicated region
      $region29: #{tpu_custom_call.1} parent=27 // pred_check
        %p511 = pneg %p97
      $region30: #{tpu_custom_call.1} parent=27 // pred_check_branch
        %513 = sbr.rel (%p511) target = $region32
      $region31: #{tpu_custom_call.1} parent=27 // pred_region
        _
      $region32: #{tpu_custom_call.1} parent=27 // pred_fallthru
        _
    $region28: #{tpu_custom_call.1} parent=5 // pred_fallthru
      _
    %p514 = scmp.le.s32.totalorder 2, %s8
    // Predicated region
    $region33: #{tpu_custom_call.1} parent=5 // pred_check
      %p515 = pneg %p514
    $region34: #{tpu_custom_call.1} parent=5 // pred_check_branch
      %517 = sbr.rel (%p515) target = $region36
    $region35: #{tpu_custom_call.1} parent=5 // pred_region
      %s518 = ssub.s32 %s8, 2
      // Predicated region
      $region37: #{tpu_custom_call.1} parent=35 // pred_check
        %p519 = pneg %p103
      $region38: #{tpu_custom_call.1} parent=35 // pred_check_branch
        %521 = sbr.rel (%p519) target = $region40
      $region39: #{tpu_custom_call.1} parent=35 // pred_region
        %p522 = scmp.lt.s32.totalorder %s19, 1
        %s523 = scalar_select %p522, %s19, 1
        %p524 = scmp.lt.s32.totalorder %s20, 0
        %s525 = scalar_select %p524, %s20, 0
        %s526 = smul.addr %s523, 8
        %s527 = sadd.s32 %s525, %s526
        %s528 = smul.addr %s527, 8
        %s529 = scalar_lea.vmem %s2, %s528
      $region40: #{tpu_custom_call.1} parent=35 // pred_fallthru
        _
    $region36: #{tpu_custom_call.1} parent=5 // pred_fallthru
      _
  $region6: #{tpu_custom_call.1} parent=0 // loop_footer
    %s12 = sadd.s32 1, %s8
  $region7: #{tpu_custom_call.1} parent=0 // loop_footer_branch
    %7 = sbr.rel target = $region3
  $region8: #{tpu_custom_call.1} parent=0 // loop_exit
    _

</llo_original>
